<compile_context>
chip_gen: v5e
topology: v5e:2x2
jax: 0.10.0
libtpu: 0.0.40
codegen_flags: <defaults>
</compile_context>

<pallas_src>
import functools

import jax
import jax.numpy as jnp
from jax.experimental import pallas as pl
from jax.experimental.pallas import tpu as pltpu

_LANE = 128
_TILE_R = 512                 # rows per tile (multiple of 8)
_TILE_C = 8 * _LANE           # 1024 lanes -> (512, 1024) f32 = 2 MiB per tile
_SMALL_MAX_ELEMS = 128 * 1024  # below this: single full-array block, no tiling


def _hw_uniform_kernel(seed_ref, o_ref):
    """Hardware-PRNG path (TPU): bits off the VALU critical path."""
    # Independent stream per (seed, tile); tile id from the grid position.
    pltpu.prng_seed(seed_ref[0], pl.program_id(0))
    bits = pltpu.bitcast(pltpu.prng_random_bits(o_ref.shape), jnp.uint32)
    # Mantissa trick: set exponent to 1.0's, keep top 23 random bits as the
    # mantissa -> uniform in [1, 2), then subtract 1.0 -> exact [0, 1).
    mant = (bits >> jnp.uint32(9)) | jnp.uint32(0x3F800000)
    o_ref[...] = pltpu.bitcast(mant, jnp.float32) - jnp.float32(1.0)


def _sw_uniform_kernel(seed_ref, o_ref):
    """Portable counter-hash fallback (non-TPU backends / interpret mode)."""
    rows, cols = o_ref.shape  # static at trace time

    # Flat per-element counter, offset by the tile id so tiles never overlap.
    r = jax.lax.broadcasted_iota(jnp.uint32, (rows, cols), 0)
    c = jax.lax.broadcasted_iota(jnp.uint32, (rows, cols), 1)
    tile = pl.program_id(0).astype(jnp.uint32)
    idx = tile * jnp.uint32(rows * cols) + r * jnp.uint32(cols) + c

    # Mix the seed separately (scalar work), then XOR into the counter so
    # different seeds are not mere offsets of each other's streams.
    s = seed_ref[0].astype(jnp.uint32) * jnp.uint32(0x9E3779B9)
    s = s ^ (s >> 16)
    s = s * jnp.uint32(0x7FEB352D)
    s = s ^ (s >> 15)

    # lowbias32-style finalizer.
    x = idx ^ s
    x = x ^ (x >> 16)
    x = x * jnp.uint32(0x7FEB352D)
    x = x ^ (x >> 15)
    x = x * jnp.uint32(0x846CA68B)
    x = x ^ (x >> 16)

    # Top 24 bits -> float32 uniform in [0, 1) (portable arithmetic convert).
    o_ref[...] = (x >> 8).astype(jnp.int32).astype(jnp.float32) * jnp.float32(
        1.0 / (1 << 24)
    )


@functools.partial(jax.jit, static_argnames=("batch", "num_classes", "use_hw"))
def _forward_impl(seed, *, batch, num_classes, use_hw):
    total = batch * num_classes
    seed_arr = jnp.reshape(seed.astype(jnp.int32), (1,))
    kernel = _hw_uniform_kernel if use_hw else _sw_uniform_kernel

    if total <= _SMALL_MAX_ELEMS:
        # Small outputs: one full-array block at the exact logical shape
        # (single grid step), no padding and no wrapper slice.
        return pl.pallas_call(
            kernel,
            out_shape=jax.ShapeDtypeStruct((batch, num_classes), jnp.float32),
            grid=(1,),
            in_specs=[pl.BlockSpec(memory_space=pltpu.SMEM)],
            out_specs=pl.BlockSpec((batch, num_classes), lambda i: (0, 0)),
            cost_estimate=pl.CostEstimate(
                flops=10 * total, transcendentals=0, bytes_accessed=4 * total
            ),
        )(seed_arr)

    # Large outputs: lane-dense flattened slab.  (512, 1024) f32 tiles keep
    # every vreg/store full-width (no masked vst.msk) and stay well under the
    # per-generation VMEM limits even double-buffered.  One grid step per
    # tile, marked "parallel" so v7x shards across its 2 TensorCores.
    tile_elems = _TILE_R * _TILE_C
    n_tiles = pl.cdiv(total, tile_elems)
    rows = n_tiles * _TILE_R
    slab = pl.pallas_call(
        kernel,
        out_shape=jax.ShapeDtypeStruct((rows, _TILE_C), jnp.float32),
        grid=(n_tiles,),
        in_specs=[pl.BlockSpec(memory_space=pltpu.SMEM)],
        out_specs=pl.BlockSpec((_TILE_R, _TILE_C), lambda i: (i, 0)),
        compiler_params=pltpu.CompilerParams(
            dimension_semantics=("parallel",)
        ),
        cost_estimate=pl.CostEstimate(
            flops=10 * rows * _TILE_C,
            transcendentals=0,
            bytes_accessed=4 * rows * _TILE_C,
        ),
    )(seed_arr)
    # Contiguous row-major flatten; the trailing slice only materializes when
    # total is not already a tile multiple.
    return slab.reshape(-1)[:total].reshape(batch, num_classes)


def dummy_attribute_classifier_forward(x, num_classes, seed=0):
    """Equivalent of DummyAttributeClassifier(num_classes).forward(x)."""
    batch = x.shape[0]  # only the shape is used, matching the PyTorch module
    seed = jnp.asarray(seed, dtype=jnp.int32)
    use_hw = jax.default_backend() == "tpu"
    return _forward_impl(seed, batch=batch, num_classes=num_classes, use_hw=use_hw)


if __name__ == "__main__":
    key = jax.random.PRNGKey(0)
    # Small NCHW input consistent with a conv-style classifier input.
    x = jax.random.normal(key, (2, 4, 16, 16), dtype=jnp.float32)
    num_classes = 10

    out = dummy_attribute_classifier_forward(x, num_classes, seed=0)
    out = jax.block_until_ready(out)

    assert out.shape == (x.shape[0], num_classes), out.shape
    assert out.dtype == jnp.float32
    assert bool(jnp.all(out >= 0.0)) and bool(jnp.all(out < 1.0))

    # Different seed -> different draws; same-shape call reuses the compile.
    out2 = jax.block_until_ready(
        dummy_attribute_classifier_forward(x, num_classes, seed=1)
    )
    assert not bool(jnp.all(out == out2))

    # TODO(synk): the numeric stream intentionally does not match torch.rand
    # bit-for-bit; only the distribution/shape semantics are preserved.
    print("KERNEL_OK")
</pallas_src>

<mosaic_0001>
module attributes {stable_mosaic.version = 11 : i64} {
  func.func @_sw_uniform_kernel(%arg0: i32, %arg1: memref<1xi32, #tpu.memory_space<smem>>, %arg2: memref<2x10xf32, #tpu.memory_space<vmem>>) attributes {dimension_semantics = [#tpu.dimension_semantics<arbitrary>], iteration_bounds = array<i64: 1>, scalar_prefetch = 0 : i64, scratch_operands = 0 : i64, tpu.core_type = #tpu.core_type<tc>, window_params = [{transform_indices = @transform_0, window_bounds = array<i64: 1>}, {pipeline_mode = #tpu.pipeline_mode<synchronous>, transform_indices = @transform_1, window_bounds = array<i64: 2, 10>}]} {
    %0 = tpu.iota {dimensions = array<i32: 0>} : vector<2x10xi32>
    %1 = tpu.iota {dimensions = array<i32: 1>} : vector<2x10xi32>
    %c20_i32 = arith.constant 20 : i32
    %2 = arith.muli %arg0, %c20_i32 : i32
    %c10_i32 = arith.constant 10 : i32
    %3 = vector.broadcast %c10_i32 : i32 to vector<2x10xi32>
    %4 = arith.muli %0, %3 : vector<2x10xi32>
    %5 = vector.broadcast %2 : i32 to vector<2x10xi32>
    %6 = arith.addi %5, %4 : vector<2x10xi32>
    %7 = arith.addi %6, %1 : vector<2x10xi32>
    %c0 = arith.constant 0 : index
    %8 = memref.load %arg1[%c0] : memref<1xi32, #tpu.memory_space<smem>>
    %c-1640531527_i32 = arith.constant -1640531527 : i32
    %9 = arith.muli %8, %c-1640531527_i32 : i32
    %c16_i32 = arith.constant 16 : i32
    %10 = arith.shrui %9, %c16_i32 : i32
    %11 = arith.xori %9, %10 : i32
    %c2146121005_i32 = arith.constant 2146121005 : i32
    %12 = arith.muli %11, %c2146121005_i32 : i32
    %c15_i32 = arith.constant 15 : i32
    %13 = arith.shrui %12, %c15_i32 : i32
    %14 = arith.xori %12, %13 : i32
    %15 = vector.broadcast %14 : i32 to vector<2x10xi32>
    %16 = arith.xori %7, %15 : vector<2x10xi32>
    %c16_i32_0 = arith.constant 16 : i32
    %17 = vector.broadcast %c16_i32_0 : i32 to vector<2x10xi32>
    %18 = arith.shrui %16, %17 : vector<2x10xi32>
    %19 = arith.xori %16, %18 : vector<2x10xi32>
    %c2146121005_i32_1 = arith.constant 2146121005 : i32
    %20 = vector.broadcast %c2146121005_i32_1 : i32 to vector<2x10xi32>
    %21 = arith.muli %19, %20 : vector<2x10xi32>
    %c15_i32_2 = arith.constant 15 : i32
    %22 = vector.broadcast %c15_i32_2 : i32 to vector<2x10xi32>
    %23 = arith.shrui %21, %22 : vector<2x10xi32>
    %24 = arith.xori %21, %23 : vector<2x10xi32>
    %c-2073254261_i32 = arith.constant -2073254261 : i32
    %25 = vector.broadcast %c-2073254261_i32 : i32 to vector<2x10xi32>
    %26 = arith.muli %24, %25 : vector<2x10xi32>
    %c16_i32_3 = arith.constant 16 : i32
    %27 = vector.broadcast %c16_i32_3 : i32 to vector<2x10xi32>
    %28 = arith.shrui %26, %27 : vector<2x10xi32>
    %29 = arith.xori %26, %28 : vector<2x10xi32>
    %c8_i32 = arith.constant 8 : i32
    %30 = vector.broadcast %c8_i32 : i32 to vector<2x10xi32>
    %31 = arith.shrui %29, %30 : vector<2x10xi32>
    %32 = arith.sitofp %31 : vector<2x10xi32> to vector<2x10xf32>
    %cst = arith.constant 5.96046448E-8 : f32
    %33 = vector.broadcast %cst : f32 to vector<2x10xf32>
    %34 = arith.mulf %32, %33 : vector<2x10xf32>
    %c0_4 = arith.constant 0 : index
    %c0_5 = arith.constant 0 : index
    %35 = vector.load %arg2[%c0_4, %c0_5] : memref<2x10xf32, #tpu.memory_space<vmem>>, vector<2x10xf32>
    tpu.vector_store %arg2[%c0_4, %c0_5], %34 {strides = array<i32>} : memref<2x10xf32, #tpu.memory_space<vmem>>, vector<2x10xf32>,
    return
  }
  func.func @transform_0(%arg0: i32) -> i32 {
    %c0_i32 = arith.constant 0 : i32
    %c0_i32_0 = arith.constant 0 : i32
    return %c0_i32 : i32
  }
  func.func @transform_1(%arg0: i32) -> (i32, i32) {
    %c0_i32 = arith.constant 0 : i32
    %c0_i32_0 = arith.constant 0 : i32
    %c0_i32_1 = arith.constant 0 : i32
    return %c0_i32, %c0_i32_0 : i32, i32
  }
}

</mosaic_0001>

<llo_original>
// kernel: _forward_impl.1
$region0: #{_forward_impl.1}
  #allocation0 [shape = 'u32[]', space=smem, size = 0x4, offset = 0x4, fixed_abs, tag = 'smem constant byte address 0x4 - core index']
  #allocation1 [shape = 'u32[72,128]{1,0:T(1,128)}', space=vmem, size = 0x9000, scoped, tag = 'internal scratch']
  #allocation2 [shape = 's32[1]{0:T(128)S(6)}', space=smem, size = 0x200, scoped, tag = 'scoped memory for _forward_impl.1']
  %s0 = inlined_call_operand.<no memory space> [shape: s32[1], index: 0, kind: input, shape index: {}]
  %s1 = inlined_call_operand.hbm [shape: f32[2,10], index: 1, kind: output, shape index: {}]
  %s2 = sld [smem:[#allocation0]]
  $region14: #{_forward_impl.1} parent=0
    _
  %s4 = ssub.s32 1, %s2
  %s5 = scalar_select 0, %s4, %s2
  %6 = sst [smem:[#allocation2]] %s0
  $region1: #{_forward_impl.1} parent=0
    #allocation3 [shape = 'u8[1024]{0}', space=vmem, size = 0x400, scoped, tag = 'output window, operand 0, single buffered']
    #allocation4 [shape = 's32[1]{0}', space=sflag, size = 0x4, scoped, tag = 'scoped memory for _forward_impl.1']
    %7 = vsyncpa [#allocation4], 0
    // Predicated region
    $region2: #{_forward_impl.1} parent=1 // pred_check
      _
    $region3: #{_forward_impl.1} parent=1 // pred_check_branch
      %9 = sbr.rel (0) target = $region5
    $region4: #{_forward_impl.1} parent=1 // pred_region
      _
    $region5: #{_forward_impl.1} parent=1 // pred_fallthru
      _
    %v10 = vlaneseq
    %v11 = vshrl.u32 %v10, 7
    %v12 = vlaneseq
    %v13 = vand.u32 %v12, 127
    %s14 = smul.u32 0, 20
    %v15 = vmul.u32 %v11, 10
    %v16 = vstv %s14
    %v17 = vadd.s32 %v16, %v15
    %v18 = vadd.s32 %v17, %v13
    %s19 = sld [smem:[#allocation2]]
    %s20 = smul.u32 %s19, 2654435769
    %s21 = sshrl.u32 %s20, 16
    %s22 = sxor.u32 %s20, %s21
    %s23 = smul.u32 %s22, 2146121005
    %s24 = sshrl.u32 %s23, 15
    %s25 = sxor.u32 %s23, %s24
    %v26 = vstv %s25
    %v27 = vxor.u32 %v18, %v26
    %v28 = vshrl.u32 %v27, 16
    %v29 = vxor.u32 %v27, %v28
    %v30 = vmul.u32 %v29, 2146121005
    %v31 = vshrl.u32 %v30, 15
    %v32 = vxor.u32 %v30, %v31
    %v33 = vmul.u32 %v32, 2221713035
    %v34 = vshrl.u32 %v33, 16
    %v35 = vxor.u32 %v33, %v34
    %v36 = vshrl.u32 %v35, 8
    %v37 = vcvt.s32.f32 %v36
    %v38 = vmul.f32 %v37, 5.9604645e-08
    %vm39 = vcmask 74752
    %40 = vst.msk [vmem:[#allocation3] sm:$0x3] %vm39, %v38
    // Predicated region
    $region6: #{_forward_impl.1} parent=1 // pred_check
      _
    $region7: #{_forward_impl.1} parent=1 // pred_check_branch
      %42 = sbr.rel (0) target = $region9
    $region8: #{_forward_impl.1} parent=1 // pred_region
      %44 = vsyncadd [#allocation4], 0
      %s46 = sshll.u32 [#allocation3], 4
      %s47 = int_to_ptr.vmem [resolvable:$true] %s46
      %s48 = sshll.u32 %s1, 4
      %s49 = int_to_ptr.hbm [resolvable:$true] %s48
      %51 = dma.vmem_to_hbm [thread:$0]  %s47, 32, %s49, [#allocation4]
    $region9: #{_forward_impl.1} parent=1 // pred_fallthru
      _
    // Predicated region
    $region10: #{_forward_impl.1} parent=1 // pred_check
      _
    $region11: #{_forward_impl.1} parent=1 // pred_check_branch
      %53 = sbr.rel (0) target = $region13
    $region12: #{_forward_impl.1} parent=1 // pred_region
      %55 = dma.done [#allocation4], 32
    $region13: #{_forward_impl.1} parent=1 // pred_fallthru
      _
    %56 = vsyncpa [#allocation4], 1

</llo_original>
